<compile_context>
chip_gen: v7x
topology: tpu7x:2x2x1
jax: 0.10.0
libtpu: 0.0.40
codegen_flags: <defaults>
</compile_context>

<pallas_src>
import jax
import jax.numpy as jnp
from jax.experimental import pallas as pl
from jax.experimental.pallas import tpu as pltpu


def cencoder_kernel(x_ref, c_ref, e0_ref, ed_ref, w1x_ref,
                    wh1_ref, bh1_ref, wh2_ref, bh2_ref, w2_ref, b2_ref,
                    out_ref):
    """Fused 4-layer MLP. Writes a single lane-dense (TB, out_pad) f32 slab."""
    x = x_ref[...].astype(jnp.bfloat16)            # in-kernel cast, hidden under MXU
    c = c_ref[...]                                  # (TB, 1) f32, values in {0., 1.}

    # fc1: x @ w1_x (MXU, f32 acc) + folded embedding bias  e0 + c*(e1 - e0)  (exact f32)
    bias1 = e0_ref[...] + c * ed_ref[...]                              # (TB, H) f32
    h = jnp.dot(x, w1x_ref[...], preferred_element_type=jnp.float32) + bias1
    h = jnp.maximum(h, 0.0)                                            # relu(fc1)

    h = jnp.dot(h.astype(jnp.bfloat16), wh1_ref[...],
                preferred_element_type=jnp.float32) + bh1_ref[...]
    h = jnp.maximum(h, 0.0)                                            # relu(fc_h1)

    h = jnp.dot(h.astype(jnp.bfloat16), wh2_ref[...],
                preferred_element_type=jnp.float32) + bh2_ref[...]
    h = jnp.maximum(h, 0.0)                                            # relu(fc_h2)

    out = jnp.dot(h.astype(jnp.bfloat16), w2_ref[...],
                  preferred_element_type=jnp.float32) + b2_ref[...]    # fc2
    out_ref[...] = out                              # lane-dense unmasked store


def _round_up(v, m):
    return ((v + m - 1) // m) * m


def prepare_params(params, input_dim):
    """One-time (outside the per-call path) parameter preparation:
    embedding fold, weight bf16 casts, lane-dense padding of the final layer."""
    w1 = params["w1"]
    hidden = w1.shape[1]
    latent2 = params["w2"].shape[1]                 # 2 * latent_dim
    out_pad = max(128, _round_up(latent2, 128))

    # Fold the embedding path of fc1 into two f32 rows:
    #   emb_proj = embedding @ w1_c + b1 ;  e0 = row0 ;  ed = row1 - row0
    w1_x = w1[:input_dim]                           # (input_dim, hidden)
    w1_c = w1[input_dim:]                           # (emb_dim,  hidden)
    emb_proj = params["embedding"] @ w1_c + params["b1"]               # (2, hidden) f32
    e0 = emb_proj[0:1]
    ed = emb_proj[1:2] - emb_proj[0:1]

    bf16 = jnp.bfloat16
    w2p = jnp.pad(params["w2"], ((0, 0), (0, out_pad - latent2)))
    b2p = jnp.pad(params["b2"], ((0, 0), (0, out_pad - latent2)))

    return dict(
        e0=e0, ed=ed,
        w1x=w1_x.astype(bf16),
        wh1=params["wh1"].astype(bf16), bh1=params["bh1"],
        wh2=params["wh2"].astype(bf16), bh2=params["bh2"],
        w2=w2p.astype(bf16), b2=b2p,
        latent2=latent2,
    )


def cencoder_forward(x, c, prep, *, block_b=256, single_buffer_weights=True):
    """Mirrors CEncoder.forward. The whole MLP is one fused pallas_call;
    padding/chunk are free view-level slices in the wrapper."""
    batch, input_dim = x.shape
    hidden = prep["w1x"].shape[1]
    out_pad = prep["w2"].shape[1]
    latent2 = prep["latent2"]
    latent = latent2 // 2

    c_col = c.astype(jnp.float32).reshape(batch, 1)

    # Batch tile: keep >= 2 grid steps when batch > 8 so the "parallel" axis
    # can shard across both v7x TensorCores; single step for the toy case.
    if batch <= 8:
        tb = batch
    else:
        tb = min(block_b, max(8, _round_up(pl.cdiv(batch, 2), 8)))
    grid = (pl.cdiv(batch, tb),)

    # Weights / biases / emb rows: whole-array resident blocks, single-buffered
    # (index map is constant so a second pipeline buffer is pure VMEM waste).
    pipe_kwargs = {"pipeline_mode": pl.Buffered(1)} if single_buffer_weights else {}
    whole = lambda shape: pl.BlockSpec(shape, lambda i: (0, 0), **pipe_kwargs)

    # --- VMEM budget + cost estimate (Python ints, trace-time only) ----------
    n_wbuf = 1 if single_buffer_weights else 2
    w_bytes = 2 * (input_dim * hidden + hidden * 2 * hidden
                   + 2 * hidden * hidden + hidden * out_pad)            # bf16 weights
    b_bytes = 4 * (hidden + hidden + 2 * hidden + hidden + out_pad)     # f32 biases/emb
    act_bytes = 2 * (tb * input_dim * 4 + tb * 4 + tb * out_pad * 4)    # 2x-buffered tiles
    live_bytes = 4 * (tb * 2 * hidden * 4)                              # f32 temporaries
    vmem_limit = int(min(64 * 2 ** 20,
                         max(8 * 2 ** 20,
                             int(1.5 * (n_wbuf * (w_bytes + b_bytes)
                                        + act_bytes + live_bytes)))))

    flops = 2 * batch * (input_dim * hidden + hidden * 2 * hidden
                         + 2 * hidden * hidden + hidden * out_pad)
    bytes_accessed = (w_bytes + b_bytes + batch * input_dim * 4 + batch * 4
                      + batch * out_pad * 4)
    cost = pl.CostEstimate(flops=flops, transcendentals=0,
                           bytes_accessed=bytes_accessed)

    out = pl.pallas_call(
        cencoder_kernel,
        out_shape=jax.ShapeDtypeStruct((batch, out_pad), jnp.float32),
        grid=grid,
        in_specs=[
            pl.BlockSpec((tb, input_dim), lambda i: (i, 0)),   # x tile (f32 in HBM)
            pl.BlockSpec((tb, 1), lambda i: (i, 0)),           # label column
            whole((1, hidden)),                                # e0
            whole((1, hidden)),                                # e1 - e0
            whole((input_dim, hidden)),                        # w1_x (bf16)
            whole((hidden, 2 * hidden)),                       # wh1 (bf16)
            whole((1, 2 * hidden)),                            # bh1
            whole((2 * hidden, hidden)),                       # wh2 (bf16)
            whole((1, hidden)),                                # bh2
            whole((hidden, out_pad)),                          # w2 (bf16, padded)
            whole((1, out_pad)),                               # b2 (padded)
        ],
        out_specs=pl.BlockSpec((tb, out_pad), lambda i: (i, 0)),
        compiler_params=pltpu.CompilerParams(
            dimension_semantics=("parallel",),
            vmem_limit_bytes=vmem_limit),
        cost_estimate=cost,
    )(
        x, c_col, prep["e0"], prep["ed"], prep["w1x"],
        prep["wh1"], prep["bh1"], prep["wh2"], prep["bh2"],
        prep["w2"], prep["b2"],
    )

    mu = out[:, :latent]                            # chunk(2, dim=1)[0]
    logvar = out[:, latent:latent2]                 # chunk(2, dim=1)[1]
    return mu, logvar


def init_params(key, input_dim, hidden_dim, latent_dim, emb_dim):
    """Deterministic synthetic parameters matching CEncoder.__init__ shapes.
    Weights stored as (in_features, out_features) so y = x @ W + b."""
    ks = jax.random.split(key, 9)

    def lin(kw, kb, fan_in, fan_out):
        bound = 1.0 / jnp.sqrt(fan_in)
        w = jax.random.uniform(kw, (fan_in, fan_out), jnp.float32, -bound, bound)
        b = jax.random.uniform(kb, (1, fan_out), jnp.float32, -bound, bound)
        return w, b

    embedding = jax.random.normal(ks[0], (2, emb_dim), jnp.float32)      # nn.Embedding(2, emb_dim)
    w1, b1 = lin(ks[1], ks[2], input_dim + emb_dim, hidden_dim)          # fc1
    wh1, bh1 = lin(ks[3], ks[4], hidden_dim, 2 * hidden_dim)             # fc_h1
    wh2, bh2 = lin(ks[5], ks[6], 2 * hidden_dim, hidden_dim)             # fc_h2
    w2, b2 = lin(ks[7], ks[8], hidden_dim, 2 * latent_dim)               # fc2
    return dict(embedding=embedding, w1=w1, b1=b1, wh1=wh1, bh1=bh1,
                wh2=wh2, bh2=bh2, w2=w2, b2=b2)


def cencoder_ref(x, c, params):
    """Pure-JAX reference mirroring the kernel arithmetic (bf16 MXU operands,
    f32 accumulation, f32 embedding bias gathered per label). Mathematically
    identical to the PyTorch concat formulation up to bf16 operand rounding."""
    def mm(a, w):
        return jnp.dot(a.astype(jnp.bfloat16), w.astype(jnp.bfloat16),
                       preferred_element_type=jnp.float32)

    input_dim = x.shape[1]
    w1_x, w1_c = params["w1"][:input_dim], params["w1"][input_dim:]
    emb_proj = params["embedding"] @ w1_c + params["b1"]                 # (2, hidden) f32
    bias1 = emb_proj[c.astype(jnp.int32)]                                # (B, hidden)
    h = jax.nn.relu(mm(x, w1_x) + bias1)
    h = jax.nn.relu(mm(h, params["wh1"]) + params["bh1"])
    h = jax.nn.relu(mm(h, params["wh2"]) + params["bh2"])
    out = mm(h, params["w2"]) + params["b2"]
    latent = params["w2"].shape[1] // 2
    return out[:, :latent], out[:, latent:]


if __name__ == "__main__":
    batch, input_dim, hidden_dim, latent_dim, emb_dim = 8, 16, 32, 8, 8

    key = jax.random.PRNGKey(0)
    k_param, k_x, k_c = jax.random.split(key, 3)

    params = init_params(k_param, input_dim, hidden_dim, latent_dim, emb_dim)
    x = jax.random.normal(k_x, (batch, input_dim), jnp.float32)
    c = jax.random.bernoulli(k_c, 0.5, (batch,)).astype(jnp.int32)   # class labels in {0,1}

    prep = prepare_params(params, input_dim)   # one-time fold / pad / bf16 cast

    try:
        mu, logvar = cencoder_forward(x, c, prep, single_buffer_weights=True)
        jax.block_until_ready((mu, logvar))
    except Exception:
        # Fallback if this JAX build rejects single-buffered (Buffered(1)) inputs.
        mu, logvar = cencoder_forward(x, c, prep, single_buffer_weights=False)
        jax.block_until_ready((mu, logvar))

    mu_ref, logvar_ref = cencoder_ref(x, c, params)
    assert mu.shape == (batch, latent_dim) and logvar.shape == (batch, latent_dim)
    assert jnp.allclose(mu, mu_ref, atol=1e-4, rtol=1e-4)
    assert jnp.allclose(logvar, logvar_ref, atol=1e-4, rtol=1e-4)

    print("KERNEL_OK")
</pallas_src>

<mosaic_0001>
module attributes {stable_mosaic.version = 11 : i64} {
  func.func @cencoder_kernel(%arg0: i32, %arg1: memref<8x16xf32, #tpu.memory_space<vmem>>, %arg2: memref<8x1xf32, #tpu.memory_space<vmem>>, %arg3: memref<1x32xf32, #tpu.memory_space<vmem>>, %arg4: memref<1x32xf32, #tpu.memory_space<vmem>>, %arg5: memref<16x32xbf16, #tpu.memory_space<vmem>>, %arg6: memref<32x64xbf16, #tpu.memory_space<vmem>>, %arg7: memref<1x64xf32, #tpu.memory_space<vmem>>, %arg8: memref<64x32xbf16, #tpu.memory_space<vmem>>, %arg9: memref<1x32xf32, #tpu.memory_space<vmem>>, %arg10: memref<32x128xbf16, #tpu.memory_space<vmem>>, %arg11: memref<1x128xf32, #tpu.memory_space<vmem>>, %arg12: memref<8x128xf32, #tpu.memory_space<vmem>>) attributes {dimension_semantics = [#tpu.dimension_semantics<parallel>], iteration_bounds = array<i64: 1>, scalar_prefetch = 0 : i64, scratch_operands = 0 : i64, tpu.core_type = #tpu.core_type<tc>, window_params = [{transform_indices = @transform_0, window_bounds = array<i64: 8, 16>}, {transform_indices = @transform_1, window_bounds = array<i64: 8, 1>}, {pipeline_mode = #tpu.pipeline_mode<synchronous>, transform_indices = @transform_2, window_bounds = array<i64: 1, 32>}, {pipeline_mode = #tpu.pipeline_mode<synchronous>, transform_indices = @transform_3, window_bounds = array<i64: 1, 32>}, {pipeline_mode = #tpu.pipeline_mode<synchronous>, transform_indices = @transform_4, window_bounds = array<i64: 16, 32>}, {pipeline_mode = #tpu.pipeline_mode<synchronous>, transform_indices = @transform_5, window_bounds = array<i64: 32, 64>}, {pipeline_mode = #tpu.pipeline_mode<synchronous>, transform_indices = @transform_6, window_bounds = array<i64: 1, 64>}, {pipeline_mode = #tpu.pipeline_mode<synchronous>, transform_indices = @transform_7, window_bounds = array<i64: 64, 32>}, {pipeline_mode = #tpu.pipeline_mode<synchronous>, transform_indices = @transform_8, window_bounds = array<i64: 1, 32>}, {pipeline_mode = #tpu.pipeline_mode<synchronous>, transform_indices = @transform_9, window_bounds = array<i64: 32, 128>}, {pipeline_mode = #tpu.pipeline_mode<synchronous>, transform_indices = @transform_10, window_bounds = array<i64: 1, 128>}, {transform_indices = @transform_11, window_bounds = array<i64: 8, 128>}]} {
    %c0 = arith.constant 0 : index
    %c0_0 = arith.constant 0 : index
    %0 = vector.load %arg1[%c0, %c0_0] : memref<8x16xf32, #tpu.memory_space<vmem>>, vector<8x16xf32>
    %1 = arith.truncf %0 : vector<8x16xf32> to vector<8x16xbf16>
    %c0_1 = arith.constant 0 : index
    %c0_2 = arith.constant 0 : index
    %2 = vector.load %arg2[%c0_1, %c0_2] : memref<8x1xf32, #tpu.memory_space<vmem>>, vector<8x1xf32>
    %c0_3 = arith.constant 0 : index
    %c0_4 = arith.constant 0 : index
    %3 = vector.load %arg3[%c0_3, %c0_4] : memref<1x32xf32, #tpu.memory_space<vmem>>, vector<1x32xf32>
    %c0_5 = arith.constant 0 : index
    %c0_6 = arith.constant 0 : index
    %4 = vector.load %arg4[%c0_5, %c0_6] : memref<1x32xf32, #tpu.memory_space<vmem>>, vector<1x32xf32>
    %5 = vector.broadcast %2 : vector<8x1xf32> to vector<8x32xf32>
    %6 = vector.broadcast %4 : vector<1x32xf32> to vector<8x32xf32>
    %7 = arith.mulf %5, %6 : vector<8x32xf32>
    %8 = vector.broadcast %3 : vector<1x32xf32> to vector<8x32xf32>
    %9 = arith.addf %8, %7 : vector<8x32xf32>
    %c0_7 = arith.constant 0 : index
    %c0_8 = arith.constant 0 : index
    %10 = vector.load %arg5[%c0_7, %c0_8] : memref<16x32xbf16, #tpu.memory_space<vmem>>, vector<16x32xbf16>
    %cst = arith.constant dense<0.000000e+00> : vector<8x32xf32>
    %11 = tpu.matmul %1, %10, %cst {dimension_numbers = #tpu.dot_dimension_numbers<[1], [0], [0], [1], [0, 0, 1, 1], [], []>} : vector<8x16xbf16>, vector<16x32xbf16>, vector<8x32xf32> -> vector<8x32xf32>
    %12 = arith.addf %11, %9 : vector<8x32xf32>
    %cst_9 = arith.constant 0.000000e+00 : f32
    %13 = vector.broadcast %cst_9 : f32 to vector<8x32xf32>
    %14 = arith.maximumf %12, %13 : vector<8x32xf32>
    %15 = arith.truncf %14 : vector<8x32xf32> to vector<8x32xbf16>
    %c0_10 = arith.constant 0 : index
    %c0_11 = arith.constant 0 : index
    %16 = vector.load %arg6[%c0_10, %c0_11] : memref<32x64xbf16, #tpu.memory_space<vmem>>, vector<32x64xbf16>
    %cst_12 = arith.constant dense<0.000000e+00> : vector<8x64xf32>
    %17 = tpu.matmul %15, %16, %cst_12 {dimension_numbers = #tpu.dot_dimension_numbers<[1], [0], [0], [1], [0, 0, 1, 1], [], []>} : vector<8x32xbf16>, vector<32x64xbf16>, vector<8x64xf32> -> vector<8x64xf32>
    %c0_13 = arith.constant 0 : index
    %c0_14 = arith.constant 0 : index
    %18 = vector.load %arg7[%c0_13, %c0_14] : memref<1x64xf32, #tpu.memory_space<vmem>>, vector<1x64xf32>
    %19 = vector.broadcast %18 : vector<1x64xf32> to vector<8x64xf32>
    %20 = arith.addf %17, %19 : vector<8x64xf32>
    %cst_15 = arith.constant 0.000000e+00 : f32
    %21 = vector.broadcast %cst_15 : f32 to vector<8x64xf32>
    %22 = arith.maximumf %20, %21 : vector<8x64xf32>
    %23 = arith.truncf %22 : vector<8x64xf32> to vector<8x64xbf16>
    %c0_16 = arith.constant 0 : index
    %c0_17 = arith.constant 0 : index
    %24 = vector.load %arg8[%c0_16, %c0_17] : memref<64x32xbf16, #tpu.memory_space<vmem>>, vector<64x32xbf16>
    %cst_18 = arith.constant dense<0.000000e+00> : vector<8x32xf32>
    %25 = tpu.matmul %23, %24, %cst_18 {dimension_numbers = #tpu.dot_dimension_numbers<[1], [0], [0], [1], [0, 0, 1, 1], [], []>} : vector<8x64xbf16>, vector<64x32xbf16>, vector<8x32xf32> -> vector<8x32xf32>
    %c0_19 = arith.constant 0 : index
    %c0_20 = arith.constant 0 : index
    %26 = vector.load %arg9[%c0_19, %c0_20] : memref<1x32xf32, #tpu.memory_space<vmem>>, vector<1x32xf32>
    %27 = vector.broadcast %26 : vector<1x32xf32> to vector<8x32xf32>
    %28 = arith.addf %25, %27 : vector<8x32xf32>
    %cst_21 = arith.constant 0.000000e+00 : f32
    %29 = vector.broadcast %cst_21 : f32 to vector<8x32xf32>
    %30 = arith.maximumf %28, %29 : vector<8x32xf32>
    %31 = arith.truncf %30 : vector<8x32xf32> to vector<8x32xbf16>
    %c0_22 = arith.constant 0 : index
    %c0_23 = arith.constant 0 : index
    %32 = vector.load %arg10[%c0_22, %c0_23] : memref<32x128xbf16, #tpu.memory_space<vmem>>, vector<32x128xbf16>
    %cst_24 = arith.constant dense<0.000000e+00> : vector<8x128xf32>
    %33 = tpu.matmul %31, %32, %cst_24 {dimension_numbers = #tpu.dot_dimension_numbers<[1], [0], [0], [1], [0, 0, 1, 1], [], []>} : vector<8x32xbf16>, vector<32x128xbf16>, vector<8x128xf32> -> vector<8x128xf32>
    %c0_25 = arith.constant 0 : index
    %c0_26 = arith.constant 0 : index
    %34 = vector.load %arg11[%c0_25, %c0_26] : memref<1x128xf32, #tpu.memory_space<vmem>>, vector<1x128xf32>
    %35 = vector.broadcast %34 : vector<1x128xf32> to vector<8x128xf32>
    %36 = arith.addf %33, %35 : vector<8x128xf32>
    %c0_27 = arith.constant 0 : index
    %c0_28 = arith.constant 0 : index
    %37 = vector.load %arg12[%c0_27, %c0_28] : memref<8x128xf32, #tpu.memory_space<vmem>>, vector<8x128xf32>
    tpu.vector_store %arg12[%c0_27, %c0_28], %36 {strides = array<i32>} : memref<8x128xf32, #tpu.memory_space<vmem>>, vector<8x128xf32>,
    return
  }
  func.func @transform_0(%arg0: i32) -> (i32, i32) {
    %c0_i32 = arith.constant 0 : i32
    %c0_i32_0 = arith.constant 0 : i32
    return %arg0, %c0_i32 : i32, i32
  }
  func.func @transform_1(%arg0: i32) -> (i32, i32) {
    %c0_i32 = arith.constant 0 : i32
    %c0_i32_0 = arith.constant 0 : i32
    return %arg0, %c0_i32 : i32, i32
  }
  func.func @transform_2(%arg0: i32) -> (i32, i32) {
    %c0_i32 = arith.constant 0 : i32
    %c0_i32_0 = arith.constant 0 : i32
    %c0_i32_1 = arith.constant 0 : i32
    return %c0_i32, %c0_i32_0 : i32, i32
  }
  func.func @transform_3(%arg0: i32) -> (i32, i32) {
    %c0_i32 = arith.constant 0 : i32
    %c0_i32_0 = arith.constant 0 : i32
    %c0_i32_1 = arith.constant 0 : i32
    return %c0_i32, %c0_i32_0 : i32, i32
  }
  func.func @transform_4(%arg0: i32) -> (i32, i32) {
    %c0_i32 = arith.constant 0 : i32
    %c0_i32_0 = arith.constant 0 : i32
    %c0_i32_1 = arith.constant 0 : i32
    return %c0_i32, %c0_i32_0 : i32, i32
  }
  func.func @transform_5(%arg0: i32) -> (i32, i32) {
    %c0_i32 = arith.constant 0 : i32
    %c0_i32_0 = arith.constant 0 : i32
    %c0_i32_1 = arith.constant 0 : i32
    return %c0_i32, %c0_i32_0 : i32, i32
  }
  func.func @transform_6(%arg0: i32) -> (i32, i32) {
    %c0_i32 = arith.constant 0 : i32
    %c0_i32_0 = arith.constant 0 : i32
    %c0_i32_1 = arith.constant 0 : i32
    return %c0_i32, %c0_i32_0 : i32, i32
  }
  func.func @transform_7(%arg0: i32) -> (i32, i32) {
    %c0_i32 = arith.constant 0 : i32
    %c0_i32_0 = arith.constant 0 : i32
    %c0_i32_1 = arith.constant 0 : i32
    return %c0_i32, %c0_i32_0 : i32, i32
  }
  func.func @transform_8(%arg0: i32) -> (i32, i32) {
    %c0_i32 = arith.constant 0 : i32
    %c0_i32_0 = arith.constant 0 : i32
    %c0_i32_1 = arith.constant 0 : i32
    return %c0_i32, %c0_i32_0 : i32, i32
  }
  func.func @transform_9(%arg0: i32) -> (i32, i32) {
    %c0_i32 = arith.constant 0 : i32
    %c0_i32_0 = arith.constant 0 : i32
    %c0_i32_1 = arith.constant 0 : i32
    return %c0_i32, %c0_i32_0 : i32, i32
  }
  func.func @transform_10(%arg0: i32) -> (i32, i32) {
    %c0_i32 = arith.constant 0 : i32
    %c0_i32_0 = arith.constant 0 : i32
    %c0_i32_1 = arith.constant 0 : i32
    return %c0_i32, %c0_i32_0 : i32, i32
  }
  func.func @transform_11(%arg0: i32) -> (i32, i32) {
    %c0_i32 = arith.constant 0 : i32
    %c0_i32_0 = arith.constant 0 : i32
    return %arg0, %c0_i32 : i32, i32
  }
}

module attributes {stable_mosaic.version = 11 : i64} {
  func.func @cencoder_kernel(%arg0: i32, %arg1: memref<8x16xf32, #tpu.memory_space<vmem>>, %arg2: memref<8x1xf32, #tpu.memory_space<vmem>>, %arg3: memref<1x32xf32, #tpu.memory_space<vmem>>, %arg4: memref<1x32xf32, #tpu.memory_space<vmem>>, %arg5: memref<16x32xbf16, #tpu.memory_space<vmem>>, %arg6: memref<32x64xbf16, #tpu.memory_space<vmem>>, %arg7: memref<1x64xf32, #tpu.memory_space<vmem>>, %arg8: memref<64x32xbf16, #tpu.memory_space<vmem>>, %arg9: memref<1x32xf32, #tpu.memory_space<vmem>>, %arg10: memref<32x128xbf16, #tpu.memory_space<vmem>>, %arg11: memref<1x128xf32, #tpu.memory_space<vmem>>, %arg12: memref<8x128xf32, #tpu.memory_space<vmem>>) attributes {dimension_semantics = [#tpu.dimension_semantics<parallel>], iteration_bounds = array<i64: 1>, scalar_prefetch = 0 : i64, scratch_operands = 0 : i64, tpu.core_type = #tpu.core_type<tc>, window_params = [{transform_indices = @transform_0, window_bounds = array<i64: 8, 16>}, {transform_indices = @transform_1, window_bounds = array<i64: 8, 1>}, {pipeline_mode = #tpu.pipeline_mode<synchronous>, transform_indices = @transform_2, window_bounds = array<i64: 1, 32>}, {pipeline_mode = #tpu.pipeline_mode<synchronous>, transform_indices = @transform_3, window_bounds = array<i64: 1, 32>}, {pipeline_mode = #tpu.pipeline_mode<synchronous>, transform_indices = @transform_4, window_bounds = array<i64: 16, 32>}, {pipeline_mode = #tpu.pipeline_mode<synchronous>, transform_indices = @transform_5, window_bounds = array<i64: 32, 64>}, {pipeline_mode = #tpu.pipeline_mode<synchronous>, transform_indices = @transform_6, window_bounds = array<i64: 1, 64>}, {pipeline_mode = #tpu.pipeline_mode<synchronous>, transform_indices = @transform_7, window_bounds = array<i64: 64, 32>}, {pipeline_mode = #tpu.pipeline_mode<synchronous>, transform_indices = @transform_8, window_bounds = array<i64: 1, 32>}, {pipeline_mode = #tpu.pipeline_mode<synchronous>, transform_indices = @transform_9, window_bounds = array<i64: 32, 128>}, {pipeline_mode = #tpu.pipeline_mode<synchronous>, transform_indices = @transform_10, window_bounds = array<i64: 1, 128>}, {transform_indices = @transform_11, window_bounds = array<i64: 8, 128>}]} {
    %c0 = arith.constant 0 : index
    %c0_0 = arith.constant 0 : index
    %0 = vector.load %arg1[%c0, %c0_0] : memref<8x16xf32, #tpu.memory_space<vmem>>, vector<8x16xf32>
    %1 = arith.truncf %0 : vector<8x16xf32> to vector<8x16xbf16>
    %c0_1 = arith.constant 0 : index
    %c0_2 = arith.constant 0 : index
    %2 = vector.load %arg2[%c0_1, %c0_2] : memref<8x1xf32, #tpu.memory_space<vmem>>, vector<8x1xf32>
    %c0_3 = arith.constant 0 : index
    %c0_4 = arith.constant 0 : index
    %3 = vector.load %arg3[%c0_3, %c0_4] : memref<1x32xf32, #tpu.memory_space<vmem>>, vector<1x32xf32>
    %c0_5 = arith.constant 0 : index
    %c0_6 = arith.constant 0 : index
    %4 = vector.load %arg4[%c0_5, %c0_6] : memref<1x32xf32, #tpu.memory_space<vmem>>, vector<1x32xf32>
    %5 = vector.broadcast %2 : vector<8x1xf32> to vector<8x32xf32>
    %6 = vector.broadcast %4 : vector<1x32xf32> to vector<8x32xf32>
    %7 = arith.mulf %5, %6 : vector<8x32xf32>
    %8 = vector.broadcast %3 : vector<1x32xf32> to vector<8x32xf32>
    %9 = arith.addf %8, %7 : vector<8x32xf32>
    %c0_7 = arith.constant 0 : index
    %c0_8 = arith.constant 0 : index
    %10 = vector.load %arg5[%c0_7, %c0_8] : memref<16x32xbf16, #tpu.memory_space<vmem>>, vector<16x32xbf16>
    %cst = arith.constant dense<0.000000e+00> : vector<8x32xf32>
    %11 = tpu.matmul %1, %10, %cst {dimension_numbers = #tpu.dot_dimension_numbers<[1], [0], [0], [1], [0, 0, 1, 1], [], []>} : vector<8x16xbf16>, vector<16x32xbf16>, vector<8x32xf32> -> vector<8x32xf32>
    %12 = arith.addf %11, %9 : vector<8x32xf32>
    %cst_9 = arith.constant 0.000000e+00 : f32
    %13 = vector.broadcast %cst_9 : f32 to vector<8x32xf32>
    %14 = arith.maximumf %12, %13 : vector<8x32xf32>
    %15 = arith.truncf %14 : vector<8x32xf32> to vector<8x32xbf16>
    %c0_10 = arith.constant 0 : index
    %c0_11 = arith.constant 0 : index
    %16 = vector.load %arg6[%c0_10, %c0_11] : memref<32x64xbf16, #tpu.memory_space<vmem>>, vector<32x64xbf16>
    %cst_12 = arith.constant dense<0.000000e+00> : vector<8x64xf32>
    %17 = tpu.matmul %15, %16, %cst_12 {dimension_numbers = #tpu.dot_dimension_numbers<[1], [0], [0], [1], [0, 0, 1, 1], [], []>} : vector<8x32xbf16>, vector<32x64xbf16>, vector<8x64xf32> -> vector<8x64xf32>
    %c0_13 = arith.constant 0 : index
    %c0_14 = arith.constant 0 : index
    %18 = vector.load %arg7[%c0_13, %c0_14] : memref<1x64xf32, #tpu.memory_space<vmem>>, vector<1x64xf32>
    %19 = vector.broadcast %18 : vector<1x64xf32> to vector<8x64xf32>
    %20 = arith.addf %17, %19 : vector<8x64xf32>
    %cst_15 = arith.constant 0.000000e+00 : f32
    %21 = vector.broadcast %cst_15 : f32 to vector<8x64xf32>
    %22 = arith.maximumf %20, %21 : vector<8x64xf32>
    %23 = arith.truncf %22 : vector<8x64xf32> to vector<8x64xbf16>
    %c0_16 = arith.constant 0 : index
    %c0_17 = arith.constant 0 : index
    %24 = vector.load %arg8[%c0_16, %c0_17] : memref<64x32xbf16, #tpu.memory_space<vmem>>, vector<64x32xbf16>
    %cst_18 = arith.constant dense<0.000000e+00> : vector<8x32xf32>
    %25 = tpu.matmul %23, %24, %cst_18 {dimension_numbers = #tpu.dot_dimension_numbers<[1], [0], [0], [1], [0, 0, 1, 1], [], []>} : vector<8x64xbf16>, vector<64x32xbf16>, vector<8x32xf32> -> vector<8x32xf32>
    %c0_19 = arith.constant 0 : index
    %c0_20 = arith.constant 0 : index
    %26 = vector.load %arg9[%c0_19, %c0_20] : memref<1x32xf32, #tpu.memory_space<vmem>>, vector<1x32xf32>
    %27 = vector.broadcast %26 : vector<1x32xf32> to vector<8x32xf32>
    %28 = arith.addf %25, %27 : vector<8x32xf32>
    %cst_21 = arith.constant 0.000000e+00 : f32
    %29 = vector.broadcast %cst_21 : f32 to vector<8x32xf32>
    %30 = arith.maximumf %28, %29 : vector<8x32xf32>
    %31 = arith.truncf %30 : vector<8x32xf32> to vector<8x32xbf16>
    %c0_22 = arith.constant 0 : index
    %c0_23 = arith.constant 0 : index
    %32 = vector.load %arg10[%c0_22, %c0_23] : memref<32x128xbf16, #tpu.memory_space<vmem>>, vector<32x128xbf16>
    %cst_24 = arith.constant dense<0.000000e+00> : vector<8x128xf32>
    %33 = tpu.matmul %31, %32, %cst_24 {dimension_numbers = #tpu.dot_dimension_numbers<[1], [0], [0], [1], [0, 0, 1, 1], [], []>} : vector<8x32xbf16>, vector<32x128xbf16>, vector<8x128xf32> -> vector<8x128xf32>
    %c0_25 = arith.constant 0 : index
    %c0_26 = arith.constant 0 : index
    %34 = vector.load %arg11[%c0_25, %c0_26] : memref<1x128xf32, #tpu.memory_space<vmem>>, vector<1x128xf32>
    %35 = vector.broadcast %34 : vector<1x128xf32> to vector<8x128xf32>
    %36 = arith.addf %33, %35 : vector<8x128xf32>
    %c0_27 = arith.constant 0 : index
    %c0_28 = arith.constant 0 : index
    %37 = vector.load %arg12[%c0_27, %c0_28] : memref<8x128xf32, #tpu.memory_space<vmem>>, vector<8x128xf32>
    tpu.vector_store %arg12[%c0_27, %c0_28], %36 {strides = array<i32>} : memref<8x128xf32, #tpu.memory_space<vmem>>, vector<8x128xf32>,
    return
  }
  func.func @transform_0(%arg0: i32) -> (i32, i32) {
    %c0_i32 = arith.constant 0 : i32
    %c0_i32_0 = arith.constant 0 : i32
    return %arg0, %c0_i32 : i32, i32
  }
  func.func @transform_1(%arg0: i32) -> (i32, i32) {
    %c0_i32 = arith.constant 0 : i32
    %c0_i32_0 = arith.constant 0 : i32
    return %arg0, %c0_i32 : i32, i32
  }
  func.func @transform_2(%arg0: i32) -> (i32, i32) {
    %c0_i32 = arith.constant 0 : i32
    %c0_i32_0 = arith.constant 0 : i32
    %c0_i32_1 = arith.constant 0 : i32
    return %c0_i32, %c0_i32_0 : i32, i32
  }
  func.func @transform_3(%arg0: i32) -> (i32, i32) {
    %c0_i32 = arith.constant 0 : i32
    %c0_i32_0 = arith.constant 0 : i32
    %c0_i32_1 = arith.constant 0 : i32
    return %c0_i32, %c0_i32_0 : i32, i32
  }
  func.func @transform_4(%arg0: i32) -> (i32, i32) {
    %c0_i32 = arith.constant 0 : i32
    %c0_i32_0 = arith.constant 0 : i32
    %c0_i32_1 = arith.constant 0 : i32
    return %c0_i32, %c0_i32_0 : i32, i32
  }
  func.func @transform_5(%arg0: i32) -> (i32, i32) {
    %c0_i32 = arith.constant 0 : i32
    %c0_i32_0 = arith.constant 0 : i32
    %c0_i32_1 = arith.constant 0 : i32
    return %c0_i32, %c0_i32_0 : i32, i32
  }
  func.func @transform_6(%arg0: i32) -> (i32, i32) {
    %c0_i32 = arith.constant 0 : i32
    %c0_i32_0 = arith.constant 0 : i32
    %c0_i32_1 = arith.constant 0 : i32
    return %c0_i32, %c0_i32_0 : i32, i32
  }
  func.func @transform_7(%arg0: i32) -> (i32, i32) {
    %c0_i32 = arith.constant 0 : i32
    %c0_i32_0 = arith.constant 0 : i32
    %c0_i32_1 = arith.constant 0 : i32
    return %c0_i32, %c0_i32_0 : i32, i32
  }
  func.func @transform_8(%arg0: i32) -> (i32, i32) {
    %c0_i32 = arith.constant 0 : i32
    %c0_i32_0 = arith.constant 0 : i32
    %c0_i32_1 = arith.constant 0 : i32
    return %c0_i32, %c0_i32_0 : i32, i32
  }
  func.func @transform_9(%arg0: i32) -> (i32, i32) {
    %c0_i32 = arith.constant 0 : i32
    %c0_i32_0 = arith.constant 0 : i32
    %c0_i32_1 = arith.constant 0 : i32
    return %c0_i32, %c0_i32_0 : i32, i32
  }
  func.func @transform_10(%arg0: i32) -> (i32, i32) {
    %c0_i32 = arith.constant 0 : i32
    %c0_i32_0 = arith.constant 0 : i32
    %c0_i32_1 = arith.constant 0 : i32
    return %c0_i32, %c0_i32_0 : i32, i32
  }
  func.func @transform_11(%arg0: i32) -> (i32, i32) {
    %c0_i32 = arith.constant 0 : i32
    %c0_i32_0 = arith.constant 0 : i32
    return %arg0, %c0_i32 : i32, i32
  }
}

</mosaic_0001>

<llo_original>
// kernel: tpu_custom_call.1
$region0: #{tpu_custom_call.1}
  #allocation0 [shape = 'u32[]', space=smem, size = 0x4, offset = 0x4, fixed_abs, tag = 'smem constant byte address 0x4 - core index']
  #allocation1 [shape = 'u32[144,128]{1,0:T(1,128)}', space=vmem, size = 0x12000, scoped, tag = 'internal scratch']
  %s0 = inlined_call_operand.vmem [shape: f32[8,16], index: 0, kind: input, shape index: {}]
  %s1 = inlined_call_operand.vmem [shape: f32[8,1], index: 1, kind: input, shape index: {}]
  %s2 = inlined_call_operand.vmem [shape: f32[1,32], index: 2, kind: input, shape index: {}]
  %s3 = inlined_call_operand.vmem [shape: f32[1,32], index: 3, kind: input, shape index: {}]
  %s4 = inlined_call_operand.vmem [shape: bf16[16,32], index: 4, kind: input, shape index: {}]
  %s5 = inlined_call_operand.vmem [shape: bf16[32,64], index: 5, kind: input, shape index: {}]
  %s6 = inlined_call_operand.vmem [shape: f32[1,64], index: 6, kind: input, shape index: {}]
  %s7 = inlined_call_operand.vmem [shape: bf16[64,32], index: 7, kind: input, shape index: {}]
  %s8 = inlined_call_operand.vmem [shape: f32[1,32], index: 8, kind: input, shape index: {}]
  %s9 = inlined_call_operand.vmem [shape: bf16[32,128], index: 9, kind: input, shape index: {}]
  %s10 = inlined_call_operand.vmem [shape: f32[1,128], index: 10, kind: input, shape index: {}]
  %s11 = inlined_call_operand.hbm [shape: f32[8,128], index: 11, kind: output, shape index: {}]
  %s12 = sld [smem:[#allocation0]]
  $region54: #{tpu_custom_call.1} parent=0
    _
  %s14 = ssub.s32 1, %s12
  %s15 = scalar_select 0, %s14, %s12
  $region1: #{tpu_custom_call.1} parent=0
    #allocation2 [shape = 'u8[4096]{0}', space=vmem, size = 0x1000, scoped, tag = 'output window, operand 0, single buffered']
    #allocation3 [shape = 's32[1]{0}', space=sflag, size = 0x4, scoped, tag = 'scoped memory for tpu_custom_call.1']
    %16 = vsyncpa [#allocation3], 0
    // Predicated region
    $region2: #{tpu_custom_call.1} parent=1 // pred_check
      _
    $region3: #{tpu_custom_call.1} parent=1 // pred_check_branch
      %18 = sbr.rel (0) target = $region5
    $region4: #{tpu_custom_call.1} parent=1 // pred_region
      _
    $region5: #{tpu_custom_call.1} parent=1 // pred_fallthru
      _
    // Predicated region
    $region6: #{tpu_custom_call.1} parent=1 // pred_check
      _
    $region7: #{tpu_custom_call.1} parent=1 // pred_check_branch
      %20 = sbr.rel (0) target = $region9
    $region8: #{tpu_custom_call.1} parent=1 // pred_region
      _
    $region9: #{tpu_custom_call.1} parent=1 // pred_fallthru
      _
    // Predicated region
    $region10: #{tpu_custom_call.1} parent=1 // pred_check
      _
    $region11: #{tpu_custom_call.1} parent=1 // pred_check_branch
      %22 = sbr.rel (0) target = $region13
    $region12: #{tpu_custom_call.1} parent=1 // pred_region
      _
    $region13: #{tpu_custom_call.1} parent=1 // pred_fallthru
      _
    // Predicated region
    $region14: #{tpu_custom_call.1} parent=1 // pred_check
      _
    $region15: #{tpu_custom_call.1} parent=1 // pred_check_branch
      %24 = sbr.rel (0) target = $region17
    $region16: #{tpu_custom_call.1} parent=1 // pred_region
      _
    $region17: #{tpu_custom_call.1} parent=1 // pred_fallthru
      _
    // Predicated region
    $region18: #{tpu_custom_call.1} parent=1 // pred_check
      _
    $region19: #{tpu_custom_call.1} parent=1 // pred_check_branch
      %26 = sbr.rel (0) target = $region21
    $region20: #{tpu_custom_call.1} parent=1 // pred_region
      _
    $region21: #{tpu_custom_call.1} parent=1 // pred_fallthru
      _
    // Predicated region
    $region22: #{tpu_custom_call.1} parent=1 // pred_check
      _
    $region23: #{tpu_custom_call.1} parent=1 // pred_check_branch
      %28 = sbr.rel (0) target = $region25
    $region24: #{tpu_custom_call.1} parent=1 // pred_region
      _
    $region25: #{tpu_custom_call.1} parent=1 // pred_fallthru
      _
    // Predicated region
    $region26: #{tpu_custom_call.1} parent=1 // pred_check
      _
    $region27: #{tpu_custom_call.1} parent=1 // pred_check_branch
      %30 = sbr.rel (0) target = $region29
    $region28: #{tpu_custom_call.1} parent=1 // pred_region
      _
    $region29: #{tpu_custom_call.1} parent=1 // pred_fallthru
      _
    // Predicated region
    $region30: #{tpu_custom_call.1} parent=1 // pred_check
      _
    $region31: #{tpu_custom_call.1} parent=1 // pred_check_branch
      %32 = sbr.rel (0) target = $region33
    $region32: #{tpu_custom_call.1} parent=1 // pred_region
      _
    $region33: #{tpu_custom_call.1} parent=1 // pred_fallthru
      _
    // Predicated region
    $region34: #{tpu_custom_call.1} parent=1 // pred_check
      _
    $region35: #{tpu_custom_call.1} parent=1 // pred_check_branch
      %34 = sbr.rel (0) target = $region37
    $region36: #{tpu_custom_call.1} parent=1 // pred_region
      _
    $region37: #{tpu_custom_call.1} parent=1 // pred_fallthru
      _
    // Predicated region
    $region38: #{tpu_custom_call.1} parent=1 // pred_check
      _
    $region39: #{tpu_custom_call.1} parent=1 // pred_check_branch
      %36 = sbr.rel (0) target = $region41
    $region40: #{tpu_custom_call.1} parent=1 // pred_region
      _
    $region41: #{tpu_custom_call.1} parent=1 // pred_fallthru
      _
    // Predicated region
    $region42: #{tpu_custom_call.1} parent=1 // pred_check
      _
    $region43: #{tpu_custom_call.1} parent=1 // pred_check_branch
      %38 = sbr.rel (0) target = $region45
    $region44: #{tpu_custom_call.1} parent=1 // pred_region
      _
    $region45: #{tpu_custom_call.1} parent=1 // pred_fallthru
      _
    %v40 = vld [vmem:[%s0] sm:$0xff]
    %v41 = vpack.c.bf16 %v40, %v40
    %v42 = vld [vmem:[%s1] sm:$0xff]
    %v43 = vld [vmem:[%s2] sm:$0x1]
    %v44 = vld [vmem:[%s3] sm:$0x1]
    %46 = vset.pattern.permute.xlu0 0
    %47 = vperm.xlu0 %46, %v42
    %v48 = vpop.permute.xlu0 %47
    %v51 = vlaneseq
    %v52 = vshrl.u32 %v51, 7
    %v53 = vsub.s32 0, %v52
    %v54 = vrot.slane %v44, %v53
    %v56 = vmul.f32 %v48, %v54
    %v58 = vlaneseq
    %v59 = vshrl.u32 %v58, 7
    %v60 = vsub.s32 0, %v59
    %v61 = vrot.slane %v43, %v60
    %v63 = vadd.f32 %v61, %v56
    %v64 = vld [vmem:[%s4] sm:$0xf]
    %v65 = vld [vmem:[%s4 + $0x4] sm:$0xf]
    %v68 = vunpack.c.l.b16 %v64
    %v69 = vunpack.c.l.b16 %v65
    %v70 = vpack.c.b16 %v69, %v68
    %vm72 = vcmask 130048
    %v74 = vsel %vm72, %v41, 0
    %76 = vmatprep.subr.bf16.mxu0 0
    %77 = vmatpush1.bf16.msra.mxu0 %v70
    %78 = vmatprep.subr.bf16.mxu0 0
    %79 = vmatpush1.bf16.msra.mxu0 0
    %80 = vmatprep.subr.bf16.mxu0 0
    %81 = vmatpush1.bf16.msra.mxu0 0
    %82 = vmatprep.subr.bf16.mxu0 0
    %83 = vmatpush1.bf16.msra.mxu0 0
    %84 = vmatprep.subr.bf16.mxu0 0
    %85 = vmatpush1.bf16.msra.mxu0 0
    %86 = vmatprep.subr.bf16.mxu0 0
    %87 = vmatpush1.bf16.msra.mxu0 0
    %88 = vmatprep.subr.bf16.mxu0 0
    %89 = vmatpush1.bf16.msra.mxu0 0
    %90 = vmatprep.subr.bf16.mxu0 0
    %91 = vmatpush1.bf16.msra.mxu0 0
    %92 = vmatprep.subr.bf16.mxu0 0
    %93 = vmatpush1.bf16.msra.mxu0 0
    %94 = vmatprep.subr.bf16.mxu0 0
    %95 = vmatpush1.bf16.msra.mxu0 0
    %96 = vmatprep.subr.bf16.mxu0 0
    %97 = vmatpush1.bf16.msra.mxu0 0
    %98 = vmatprep.subr.bf16.mxu0 0
    %99 = vmatpush1.bf16.msra.mxu0 0
    %100 = vmatprep.subr.bf16.mxu0 0
    %101 = vmatpush1.bf16.msra.mxu0 0
    %102 = vmatprep.subr.bf16.mxu0 0
    %103 = vmatpush1.bf16.msra.mxu0 0
    %104 = vmatprep.subr.bf16.mxu0 0
    %105 = vmatpush1.bf16.msra.mxu0 0
    %106 = vmatprep.subr.bf16.mxu0 0
    %107 = vmatpush1.bf16.msra.mxu0 0
    %108 = vmatprep.mubr.bf16.mxu0 0
    %109 = vmatmul.mubr.bf16.gmra.mrb[0].mxu0 %v74
    %v110 = vpop.f32.mrb[0].mxu0
    %v111 = vadd.f32 %v63, %v110
    %v112 = vpop.f32.mrb[0].mxu0
    %v113 = vpop.f32.mrb[0].mxu0
    %v114 = vpop.f32.mrb[0].mxu0
    %115 = vdwg.mxu0
    %v116 = vmax.f32 %v111, 0.0
    %v117 = vpack.c.bf16 %v116, %v116
    %v118 = vld [vmem:[%s5] sm:$0xf]
    %v119 = vld [vmem:[%s5 + $0x4] sm:$0xf]
    %v120 = vld [vmem:[%s5 + $0x8] sm:$0xf]
    %v121 = vld [vmem:[%s5 + $0xc] sm:$0xf]
    %v122 = vld [vmem:[%s6] sm:$0x1]
    %v124 = vlaneseq
    %v125 = vshrl.u32 %v124, 7
    %v126 = vsub.s32 0, %v125
    %v127 = vrot.slane %v122, %v126
    %v133 = vunpack.c.l.b16 %v118
    %v134 = vunpack.c.l.b16 %v119
    %v135 = vunpack.c.l.b16 %v120
    %v136 = vunpack.c.l.b16 %v121
    %v137 = vpack.c.b16 %v134, %v133
    %v138 = vpack.c.b16 %v136, %v135
    %vm141 = vcmask 261120
    %v143 = vsel %vm141, %v117, 0
    %145 = vmatprep.subr.bf16.mxu0 0
    %146 = vmatpush1.bf16.msra.mxu0 %v137
    %147 = vmatprep.subr.bf16.mxu0 0
    %148 = vmatpush1.bf16.msra.mxu0 %v138
    %149 = vmatprep.subr.bf16.mxu0 0
    %150 = vmatpush1.bf16.msra.mxu0 0
    %151 = vmatprep.subr.bf16.mxu0 0
    %152 = vmatpush1.bf16.msra.mxu0 0
    %153 = vmatprep.subr.bf16.mxu0 0
    %154 = vmatpush1.bf16.msra.mxu0 0
    %155 = vmatprep.subr.bf16.mxu0 0
    %156 = vmatpush1.bf16.msra.mxu0 0
    %157 = vmatprep.subr.bf16.mxu0 0
    %158 = vmatpush1.bf16.msra.mxu0 0
    %159 = vmatprep.subr.bf16.mxu0 0
    %160 = vmatpush1.bf16.msra.mxu0 0
    %161 = vmatprep.subr.bf16.mxu0 0
    %162 = vmatpush1.bf16.msra.mxu0 0
    %163 = vmatprep.subr.bf16.mxu0 0
    %164 = vmatpush1.bf16.msra.mxu0 0
    %165 = vmatprep.subr.bf16.mxu0 0
    %166 = vmatpush1.bf16.msra.mxu0 0
    %167 = vmatprep.subr.bf16.mxu0 0
    %168 = vmatpush1.bf16.msra.mxu0 0
    %169 = vmatprep.subr.bf16.mxu0 0
    %170 = vmatpush1.bf16.msra.mxu0 0
    %171 = vmatprep.subr.bf16.mxu0 0
    %172 = vmatpush1.bf16.msra.mxu0 0
    %173 = vmatprep.subr.bf16.mxu0 0
    %174 = vmatpush1.bf16.msra.mxu0 0
    %175 = vmatprep.subr.bf16.mxu0 0
    %176 = vmatpush1.bf16.msra.mxu0 0
    %177 = vmatprep.mubr.bf16.mxu0 0
    %178 = vmatmul.mubr.bf16.gmra.mrb[0].mxu0 %v143
    %v179 = vpop.f32.mrb[0].mxu0
    %v180 = vadd.f32 %v127, %v179
    %v181 = vpop.f32.mrb[0].mxu0
    %v182 = vpop.f32.mrb[0].mxu0
    %v183 = vpop.f32.mrb[0].mxu0
    %184 = vdwg.mxu0
    %v185 = vmax.f32 %v180, 0.0
    %v186 = vpack.c.bf16 %v185, %v185
    %v187 = vld [vmem:[%s7] sm:$0xf]
    %v188 = vld [vmem:[%s7 + $0x4] sm:$0xf]
    %v189 = vld [vmem:[%s7 + $0x8] sm:$0xf]
    %v190 = vld [vmem:[%s7 + $0xc] sm:$0xf]
    %v191 = vld [vmem:[%s7 + $0x10] sm:$0xf]
    %v192 = vld [vmem:[%s7 + $0x14] sm:$0xf]
    %v193 = vld [vmem:[%s7 + $0x18] sm:$0xf]
    %v194 = vld [vmem:[%s7 + $0x1c] sm:$0xf]
    %v195 = vld [vmem:[%s8] sm:$0x1]
    %v197 = vlaneseq
    %v198 = vshrl.u32 %v197, 7
    %v199 = vsub.s32 0, %v198
    %v200 = vrot.slane %v195, %v199
    %v210 = vunpack.c.l.b16 %v187
    %v211 = vunpack.c.l.b16 %v188
    %v212 = vunpack.c.l.b16 %v189
    %v213 = vunpack.c.l.b16 %v190
    %v214 = vunpack.c.l.b16 %v191
    %v215 = vunpack.c.l.b16 %v192
    %v216 = vunpack.c.l.b16 %v193
    %v217 = vunpack.c.l.b16 %v194
    %v218 = vpack.c.b16 %v211, %v210
    %v219 = vpack.c.b16 %v213, %v212
    %v220 = vpack.c.b16 %v215, %v214
    %v221 = vpack.c.b16 %v217, %v216
    %vm226 = vcmask 523264
    %v228 = vsel %vm226, %v186, 0
    %230 = vmatprep.subr.bf16.mxu0 0
    %231 = vmatpush1.bf16.msra.mxu0 %v218
    %232 = vmatprep.subr.bf16.mxu0 0
    %233 = vmatpush1.bf16.msra.mxu0 %v219
    %234 = vmatprep.subr.bf16.mxu0 0
    %235 = vmatpush1.bf16.msra.mxu0 %v220
    %236 = vmatprep.subr.bf16.mxu0 0
    %237 = vmatpush1.bf16.msra.mxu0 %v221
    %238 = vmatprep.subr.bf16.mxu0 0
    %239 = vmatpush1.bf16.msra.mxu0 0
    %240 = vmatprep.subr.bf16.mxu0 0
    %241 = vmatpush1.bf16.msra.mxu0 0
    %242 = vmatprep.subr.bf16.mxu0 0
    %243 = vmatpush1.bf16.msra.mxu0 0
    %244 = vmatprep.subr.bf16.mxu0 0
    %245 = vmatpush1.bf16.msra.mxu0 0
    %246 = vmatprep.subr.bf16.mxu0 0
    %247 = vmatpush1.bf16.msra.mxu0 0
    %248 = vmatprep.subr.bf16.mxu0 0
    %249 = vmatpush1.bf16.msra.mxu0 0
    %250 = vmatprep.subr.bf16.mxu0 0
    %251 = vmatpush1.bf16.msra.mxu0 0
    %252 = vmatprep.subr.bf16.mxu0 0
    %253 = vmatpush1.bf16.msra.mxu0 0
    %254 = vmatprep.subr.bf16.mxu0 0
    %255 = vmatpush1.bf16.msra.mxu0 0
    %256 = vmatprep.subr.bf16.mxu0 0
    %257 = vmatpush1.bf16.msra.mxu0 0
    %258 = vmatprep.subr.bf16.mxu0 0
    %259 = vmatpush1.bf16.msra.mxu0 0
    %260 = vmatprep.subr.bf16.mxu0 0
    %261 = vmatpush1.bf16.msra.mxu0 0
    %262 = vmatprep.mubr.bf16.mxu0 0
    %263 = vmatmul.mubr.bf16.gmra.mrb[0].mxu0 %v228
    %v264 = vpop.f32.mrb[0].mxu0
    %v265 = vadd.f32 %v200, %v264
    %v266 = vpop.f32.mrb[0].mxu0
    %v267 = vpop.f32.mrb[0].mxu0
    %v268 = vpop.f32.mrb[0].mxu0
    %269 = vdwg.mxu0
    %v270 = vmax.f32 %v265, 0.0
    %v271 = vpack.c.bf16 %v270, %v270
    %v272 = vld [vmem:[%s9] sm:$0xf]
    %v273 = vld [vmem:[%s9 + $0x4] sm:$0xf]
    %v274 = vld [vmem:[%s9 + $0x8] sm:$0xf]
    %v275 = vld [vmem:[%s9 + $0xc] sm:$0xf]
    %v276 = vld [vmem:[%s10] sm:$0x1]
    %v278 = vlaneseq
    %v279 = vshrl.u32 %v278, 7
    %v280 = vsub.s32 0, %v279
    %v281 = vrot.slane %v276, %v280
    %v287 = vunpack.c.l.b16 %v272
    %v288 = vunpack.c.l.b16 %v273
    %v289 = vunpack.c.l.b16 %v274
    %v290 = vunpack.c.l.b16 %v275
    %v291 = vpack.c.b16 %v288, %v287
    %v292 = vpack.c.b16 %v290, %v289
    %v296 = vsel %vm141, %v271, 0
    %298 = vmatprep.subr.bf16.mxu0 0
    %299 = vmatpush1.bf16.msra.mxu0 %v291
    %300 = vmatprep.subr.bf16.mxu0 0
    %301 = vmatpush1.bf16.msra.mxu0 %v292
    %302 = vmatprep.subr.bf16.mxu0 0
    %303 = vmatpush1.bf16.msra.mxu0 0
    %304 = vmatprep.subr.bf16.mxu0 0
    %305 = vmatpush1.bf16.msra.mxu0 0
    %306 = vmatprep.subr.bf16.mxu0 0
    %307 = vmatpush1.bf16.msra.mxu0 0
    %308 = vmatprep.subr.bf16.mxu0 0
    %309 = vmatpush1.bf16.msra.mxu0 0
    %310 = vmatprep.subr.bf16.mxu0 0
    %311 = vmatpush1.bf16.msra.mxu0 0
    %312 = vmatprep.subr.bf16.mxu0 0
    %313 = vmatpush1.bf16.msra.mxu0 0
    %314 = vmatprep.subr.bf16.mxu0 0
    %315 = vmatpush1.bf16.msra.mxu0 0
    %316 = vmatprep.subr.bf16.mxu0 0
    %317 = vmatpush1.bf16.msra.mxu0 0
    %318 = vmatprep.subr.bf16.mxu0 0
    %319 = vmatpush1.bf16.msra.mxu0 0
    %320 = vmatprep.subr.bf16.mxu0 0
    %321 = vmatpush1.bf16.msra.mxu0 0
    %322 = vmatprep.subr.bf16.mxu0 0
    %323 = vmatpush1.bf16.msra.mxu0 0
    %324 = vmatprep.subr.bf16.mxu0 0
    %325 = vmatpush1.bf16.msra.mxu0 0
    %326 = vmatprep.subr.bf16.mxu0 0
    %327 = vmatpush1.bf16.msra.mxu0 0
    %328 = vmatprep.subr.bf16.mxu0 0
    %329 = vmatpush1.bf16.msra.mxu0 0
    %330 = vmatprep.mubr.bf16.mxu0 0
    %331 = vmatmul.mubr.bf16.gmra.mrb[0].mxu0 %v296
    %v332 = vpop.f32.mrb[0].mxu0
    %v333 = vadd.f32 %v281, %v332
    %v334 = vpop.f32.mrb[0].mxu0
    %v335 = vpop.f32.mrb[0].mxu0
    %v336 = vpop.f32.mrb[0].mxu0
    %337 = vdwg.mxu0
    %338 = vst [vmem:[#allocation2] sm:$0xff] %v333
    // Predicated region
    $region46: #{tpu_custom_call.1} parent=1 // pred_check
      _
    $region47: #{tpu_custom_call.1} parent=1 // pred_check_branch
      %340 = sbr.rel (0) target = $region49
    $region48: #{tpu_custom_call.1} parent=1 // pred_region
      %s342 = ssub.s32 128, 128
      %343 = vsyncadd [#allocation3], %s342
      %s345 = sshll.u32 [#allocation2], 4
      %s346 = int_to_ptr.vmem [resolvable:$true] %s345
      %348 = dma.vmem_to_hbm [thread:$0]  %s346, 128, %s11, [#allocation3]
    $region49: #{tpu_custom_call.1} parent=1 // pred_fallthru
      _
    // Predicated region
    $region50: #{tpu_custom_call.1} parent=1 // pred_check
      _
    $region51: #{tpu_custom_call.1} parent=1 // pred_check_branch
      %350 = sbr.rel (0) target = $region53
    $region52: #{tpu_custom_call.1} parent=1 // pred_region
      %351 = dma.done [#allocation3], 128
    $region53: #{tpu_custom_call.1} parent=1 // pred_fallthru
      _
    %352 = vsyncpa [#allocation3], 1

// kernel: tpu_custom_call.1
$region0: #{tpu_custom_call.1}
  #allocation0 [shape = 'u32[]', space=smem, size = 0x4, offset = 0x4, fixed_abs, tag = 'smem constant byte address 0x4 - core index']
  #allocation1 [shape = 'u32[144,128]{1,0:T(1,128)}', space=vmem, size = 0x12000, scoped, tag = 'internal scratch']
  %s0 = inlined_call_operand.vmem [shape: f32[8,16], index: 0, kind: input, shape index: {}]
  %s1 = inlined_call_operand.vmem [shape: f32[8,1], index: 1, kind: input, shape index: {}]
  %s2 = inlined_call_operand.vmem [shape: f32[1,32], index: 2, kind: input, shape index: {}]
  %s3 = inlined_call_operand.vmem [shape: f32[1,32], index: 3, kind: input, shape index: {}]
  %s4 = inlined_call_operand.vmem [shape: bf16[16,32], index: 4, kind: input, shape index: {}]
  %s5 = inlined_call_operand.vmem [shape: bf16[32,64], index: 5, kind: input, shape index: {}]
  %s6 = inlined_call_operand.vmem [shape: f32[1,64], index: 6, kind: input, shape index: {}]
  %s7 = inlined_call_operand.vmem [shape: bf16[64,32], index: 7, kind: input, shape index: {}]
  %s8 = inlined_call_operand.vmem [shape: f32[1,32], index: 8, kind: input, shape index: {}]
  %s9 = inlined_call_operand.vmem [shape: bf16[32,128], index: 9, kind: input, shape index: {}]
  %s10 = inlined_call_operand.vmem [shape: f32[1,128], index: 10, kind: input, shape index: {}]
  %s11 = inlined_call_operand.hbm [shape: f32[8,128], index: 11, kind: output, shape index: {}]
  %s12 = sld [smem:[#allocation0]]
  $region54: #{tpu_custom_call.1} parent=0
    _
  %s14 = ssub.s32 1, %s12
  %s15 = scalar_select 0, %s14, %s12
  $region1: #{tpu_custom_call.1} parent=0
    #allocation2 [shape = 'u8[4096]{0}', space=vmem, size = 0x1000, scoped, tag = 'output window, operand 0, single buffered']
    #allocation3 [shape = 's32[1]{0}', space=sflag, size = 0x4, scoped, tag = 'scoped memory for tpu_custom_call.1']
    %16 = vsyncpa [#allocation3], 0
    // Predicated region
    $region2: #{tpu_custom_call.1} parent=1 // pred_check
      _
    $region3: #{tpu_custom_call.1} parent=1 // pred_check_branch
      %18 = sbr.rel (0) target = $region5
    $region4: #{tpu_custom_call.1} parent=1 // pred_region
      _
    $region5: #{tpu_custom_call.1} parent=1 // pred_fallthru
      _
    // Predicated region
    $region6: #{tpu_custom_call.1} parent=1 // pred_check
      _
    $region7: #{tpu_custom_call.1} parent=1 // pred_check_branch
      %20 = sbr.rel (0) target = $region9
    $region8: #{tpu_custom_call.1} parent=1 // pred_region
      _
    $region9: #{tpu_custom_call.1} parent=1 // pred_fallthru
      _
    // Predicated region
    $region10: #{tpu_custom_call.1} parent=1 // pred_check
      _
    $region11: #{tpu_custom_call.1} parent=1 // pred_check_branch
      %22 = sbr.rel (0) target = $region13
    $region12: #{tpu_custom_call.1} parent=1 // pred_region
      _
    $region13: #{tpu_custom_call.1} parent=1 // pred_fallthru
      _
    // Predicated region
    $region14: #{tpu_custom_call.1} parent=1 // pred_check
      _
    $region15: #{tpu_custom_call.1} parent=1 // pred_check_branch
      %24 = sbr.rel (0) target = $region17
    $region16: #{tpu_custom_call.1} parent=1 // pred_region
      _
    $region17: #{tpu_custom_call.1} parent=1 // pred_fallthru
      _
    // Predicated region
    $region18: #{tpu_custom_call.1} parent=1 // pred_check
      _
    $region19: #{tpu_custom_call.1} parent=1 // pred_check_branch
      %26 = sbr.rel (0) target = $region21
    $region20: #{tpu_custom_call.1} parent=1 // pred_region
      _
    $region21: #{tpu_custom_call.1} parent=1 // pred_fallthru
      _
    // Predicated region
    $region22: #{tpu_custom_call.1} parent=1 // pred_check
      _
    $region23: #{tpu_custom_call.1} parent=1 // pred_check_branch
      %28 = sbr.rel (0) target = $region25
    $region24: #{tpu_custom_call.1} parent=1 // pred_region
      _
    $region25: #{tpu_custom_call.1} parent=1 // pred_fallthru
      _
    // Predicated region
    $region26: #{tpu_custom_call.1} parent=1 // pred_check
      _
    $region27: #{tpu_custom_call.1} parent=1 // pred_check_branch
      %30 = sbr.rel (0) target = $region29
    $region28: #{tpu_custom_call.1} parent=1 // pred_region
      _
    $region29: #{tpu_custom_call.1} parent=1 // pred_fallthru
      _
    // Predicated region
    $region30: #{tpu_custom_call.1} parent=1 // pred_check
      _
    $region31: #{tpu_custom_call.1} parent=1 // pred_check_branch
      %32 = sbr.rel (0) target = $region33
    $region32: #{tpu_custom_call.1} parent=1 // pred_region
      _
    $region33: #{tpu_custom_call.1} parent=1 // pred_fallthru
      _
    // Predicated region
    $region34: #{tpu_custom_call.1} parent=1 // pred_check
      _
    $region35: #{tpu_custom_call.1} parent=1 // pred_check_branch
      %34 = sbr.rel (0) target = $region37
    $region36: #{tpu_custom_call.1} parent=1 // pred_region
      _
    $region37: #{tpu_custom_call.1} parent=1 // pred_fallthru
      _
    // Predicated region
    $region38: #{tpu_custom_call.1} parent=1 // pred_check
      _
    $region39: #{tpu_custom_call.1} parent=1 // pred_check_branch
      %36 = sbr.rel (0) target = $region41
    $region40: #{tpu_custom_call.1} parent=1 // pred_region
      _
    $region41: #{tpu_custom_call.1} parent=1 // pred_fallthru
      _
    // Predicated region
    $region42: #{tpu_custom_call.1} parent=1 // pred_check
      _
    $region43: #{tpu_custom_call.1} parent=1 // pred_check_branch
      %38 = sbr.rel (0) target = $region45
    $region44: #{tpu_custom_call.1} parent=1 // pred_region
      _
    $region45: #{tpu_custom_call.1} parent=1 // pred_fallthru
      _
    %v40 = vld [vmem:[%s0] sm:$0xff]
    %v41 = vpack.c.bf16 %v40, %v40
    %v42 = vld [vmem:[%s1] sm:$0xff]
    %v43 = vld [vmem:[%s2] sm:$0x1]
    %v44 = vld [vmem:[%s3] sm:$0x1]
    %46 = vset.pattern.permute.xlu0 0
    %47 = vperm.xlu0 %46, %v42
    %v48 = vpop.permute.xlu0 %47
    %v51 = vlaneseq
    %v52 = vshrl.u32 %v51, 7
    %v53 = vsub.s32 0, %v52
    %v54 = vrot.slane %v44, %v53
    %v56 = vmul.f32 %v48, %v54
    %v58 = vlaneseq
    %v59 = vshrl.u32 %v58, 7
    %v60 = vsub.s32 0, %v59
    %v61 = vrot.slane %v43, %v60
    %v63 = vadd.f32 %v61, %v56
    %v64 = vld [vmem:[%s4] sm:$0xf]
    %v65 = vld [vmem:[%s4 + $0x4] sm:$0xf]
    %v68 = vunpack.c.l.b16 %v64
    %v69 = vunpack.c.l.b16 %v65
    %v70 = vpack.c.b16 %v69, %v68
    %vm72 = vcmask 130048
    %v74 = vsel %vm72, %v41, 0
    %76 = vmatprep.subr.bf16.mxu0 0
    %77 = vmatpush1.bf16.msra.mxu0 %v70
    %78 = vmatprep.subr.bf16.mxu0 0
    %79 = vmatpush1.bf16.msra.mxu0 0
    %80 = vmatprep.subr.bf16.mxu0 0
    %81 = vmatpush1.bf16.msra.mxu0 0
    %82 = vmatprep.subr.bf16.mxu0 0
    %83 = vmatpush1.bf16.msra.mxu0 0
    %84 = vmatprep.subr.bf16.mxu0 0
    %85 = vmatpush1.bf16.msra.mxu0 0
    %86 = vmatprep.subr.bf16.mxu0 0
    %87 = vmatpush1.bf16.msra.mxu0 0
    %88 = vmatprep.subr.bf16.mxu0 0
    %89 = vmatpush1.bf16.msra.mxu0 0
    %90 = vmatprep.subr.bf16.mxu0 0
    %91 = vmatpush1.bf16.msra.mxu0 0
    %92 = vmatprep.subr.bf16.mxu0 0
    %93 = vmatpush1.bf16.msra.mxu0 0
    %94 = vmatprep.subr.bf16.mxu0 0
    %95 = vmatpush1.bf16.msra.mxu0 0
    %96 = vmatprep.subr.bf16.mxu0 0
    %97 = vmatpush1.bf16.msra.mxu0 0
    %98 = vmatprep.subr.bf16.mxu0 0
    %99 = vmatpush1.bf16.msra.mxu0 0
    %100 = vmatprep.subr.bf16.mxu0 0
    %101 = vmatpush1.bf16.msra.mxu0 0
    %102 = vmatprep.subr.bf16.mxu0 0
    %103 = vmatpush1.bf16.msra.mxu0 0
    %104 = vmatprep.subr.bf16.mxu0 0
    %105 = vmatpush1.bf16.msra.mxu0 0
    %106 = vmatprep.subr.bf16.mxu0 0
    %107 = vmatpush1.bf16.msra.mxu0 0
    %108 = vmatprep.mubr.bf16.mxu0 0
    %109 = vmatmul.mubr.bf16.gmra.mrb[0].mxu0 %v74
    %v110 = vpop.f32.mrb[0].mxu0
    %v111 = vadd.f32 %v63, %v110
    %v112 = vpop.f32.mrb[0].mxu0
    %v113 = vpop.f32.mrb[0].mxu0
    %v114 = vpop.f32.mrb[0].mxu0
    %115 = vdwg.mxu0
    %v116 = vmax.f32 %v111, 0.0
    %v117 = vpack.c.bf16 %v116, %v116
    %v118 = vld [vmem:[%s5] sm:$0xf]
    %v119 = vld [vmem:[%s5 + $0x4] sm:$0xf]
    %v120 = vld [vmem:[%s5 + $0x8] sm:$0xf]
    %v121 = vld [vmem:[%s5 + $0xc] sm:$0xf]
    %v122 = vld [vmem:[%s6] sm:$0x1]
    %v124 = vlaneseq
    %v125 = vshrl.u32 %v124, 7
    %v126 = vsub.s32 0, %v125
    %v127 = vrot.slane %v122, %v126
    %v133 = vunpack.c.l.b16 %v118
    %v134 = vunpack.c.l.b16 %v119
    %v135 = vunpack.c.l.b16 %v120
    %v136 = vunpack.c.l.b16 %v121
    %v137 = vpack.c.b16 %v134, %v133
    %v138 = vpack.c.b16 %v136, %v135
    %vm141 = vcmask 261120
    %v143 = vsel %vm141, %v117, 0
    %145 = vmatprep.subr.bf16.mxu0 0
    %146 = vmatpush1.bf16.msra.mxu0 %v137
    %147 = vmatprep.subr.bf16.mxu0 0
    %148 = vmatpush1.bf16.msra.mxu0 %v138
    %149 = vmatprep.subr.bf16.mxu0 0
    %150 = vmatpush1.bf16.msra.mxu0 0
    %151 = vmatprep.subr.bf16.mxu0 0
    %152 = vmatpush1.bf16.msra.mxu0 0
    %153 = vmatprep.subr.bf16.mxu0 0
    %154 = vmatpush1.bf16.msra.mxu0 0
    %155 = vmatprep.subr.bf16.mxu0 0
    %156 = vmatpush1.bf16.msra.mxu0 0
    %157 = vmatprep.subr.bf16.mxu0 0
    %158 = vmatpush1.bf16.msra.mxu0 0
    %159 = vmatprep.subr.bf16.mxu0 0
    %160 = vmatpush1.bf16.msra.mxu0 0
    %161 = vmatprep.subr.bf16.mxu0 0
    %162 = vmatpush1.bf16.msra.mxu0 0
    %163 = vmatprep.subr.bf16.mxu0 0
    %164 = vmatpush1.bf16.msra.mxu0 0
    %165 = vmatprep.subr.bf16.mxu0 0
    %166 = vmatpush1.bf16.msra.mxu0 0
    %167 = vmatprep.subr.bf16.mxu0 0
    %168 = vmatpush1.bf16.msra.mxu0 0
    %169 = vmatprep.subr.bf16.mxu0 0
    %170 = vmatpush1.bf16.msra.mxu0 0
    %171 = vmatprep.subr.bf16.mxu0 0
    %172 = vmatpush1.bf16.msra.mxu0 0
    %173 = vmatprep.subr.bf16.mxu0 0
    %174 = vmatpush1.bf16.msra.mxu0 0
    %175 = vmatprep.subr.bf16.mxu0 0
    %176 = vmatpush1.bf16.msra.mxu0 0
    %177 = vmatprep.mubr.bf16.mxu0 0
    %178 = vmatmul.mubr.bf16.gmra.mrb[0].mxu0 %v143
    %v179 = vpop.f32.mrb[0].mxu0
    %v180 = vadd.f32 %v127, %v179
    %v181 = vpop.f32.mrb[0].mxu0
    %v182 = vpop.f32.mrb[0].mxu0
    %v183 = vpop.f32.mrb[0].mxu0
    %184 = vdwg.mxu0
    %v185 = vmax.f32 %v180, 0.0
    %v186 = vpack.c.bf16 %v185, %v185
    %v187 = vld [vmem:[%s7] sm:$0xf]
    %v188 = vld [vmem:[%s7 + $0x4] sm:$0xf]
    %v189 = vld [vmem:[%s7 + $0x8] sm:$0xf]
    %v190 = vld [vmem:[%s7 + $0xc] sm:$0xf]
    %v191 = vld [vmem:[%s7 + $0x10] sm:$0xf]
    %v192 = vld [vmem:[%s7 + $0x14] sm:$0xf]
    %v193 = vld [vmem:[%s7 + $0x18] sm:$0xf]
    %v194 = vld [vmem:[%s7 + $0x1c] sm:$0xf]
    %v195 = vld [vmem:[%s8] sm:$0x1]
    %v197 = vlaneseq
    %v198 = vshrl.u32 %v197, 7
    %v199 = vsub.s32 0, %v198
    %v200 = vrot.slane %v195, %v199
    %v210 = vunpack.c.l.b16 %v187
    %v211 = vunpack.c.l.b16 %v188
    %v212 = vunpack.c.l.b16 %v189
    %v213 = vunpack.c.l.b16 %v190
    %v214 = vunpack.c.l.b16 %v191
    %v215 = vunpack.c.l.b16 %v192
    %v216 = vunpack.c.l.b16 %v193
    %v217 = vunpack.c.l.b16 %v194
    %v218 = vpack.c.b16 %v211, %v210
    %v219 = vpack.c.b16 %v213, %v212
    %v220 = vpack.c.b16 %v215, %v214
    %v221 = vpack.c.b16 %v217, %v216
    %vm226 = vcmask 523264
    %v228 = vsel %vm226, %v186, 0
    %230 = vmatprep.subr.bf16.mxu0 0
    %231 = vmatpush1.bf16.msra.mxu0 %v218
    %232 = vmatprep.subr.bf16.mxu0 0
    %233 = vmatpush1.bf16.msra.mxu0 %v219
    %234 = vmatprep.subr.bf16.mxu0 0
    %235 = vmatpush1.bf16.msra.mxu0 %v220
    %236 = vmatprep.subr.bf16.mxu0 0
    %237 = vmatpush1.bf16.msra.mxu0 %v221
    %238 = vmatprep.subr.bf16.mxu0 0
    %239 = vmatpush1.bf16.msra.mxu0 0
    %240 = vmatprep.subr.bf16.mxu0 0
    %241 = vmatpush1.bf16.msra.mxu0 0
    %242 = vmatprep.subr.bf16.mxu0 0
    %243 = vmatpush1.bf16.msra.mxu0 0
    %244 = vmatprep.subr.bf16.mxu0 0
    %245 = vmatpush1.bf16.msra.mxu0 0
    %246 = vmatprep.subr.bf16.mxu0 0
    %247 = vmatpush1.bf16.msra.mxu0 0
    %248 = vmatprep.subr.bf16.mxu0 0
    %249 = vmatpush1.bf16.msra.mxu0 0
    %250 = vmatprep.subr.bf16.mxu0 0
    %251 = vmatpush1.bf16.msra.mxu0 0
    %252 = vmatprep.subr.bf16.mxu0 0
    %253 = vmatpush1.bf16.msra.mxu0 0
    %254 = vmatprep.subr.bf16.mxu0 0
    %255 = vmatpush1.bf16.msra.mxu0 0
    %256 = vmatprep.subr.bf16.mxu0 0
    %257 = vmatpush1.bf16.msra.mxu0 0
    %258 = vmatprep.subr.bf16.mxu0 0
    %259 = vmatpush1.bf16.msra.mxu0 0
    %260 = vmatprep.subr.bf16.mxu0 0
    %261 = vmatpush1.bf16.msra.mxu0 0
    %262 = vmatprep.mubr.bf16.mxu0 0
    %263 = vmatmul.mubr.bf16.gmra.mrb[0].mxu0 %v228
    %v264 = vpop.f32.mrb[0].mxu0
    %v265 = vadd.f32 %v200, %v264
    %v266 = vpop.f32.mrb[0].mxu0
    %v267 = vpop.f32.mrb[0].mxu0
    %v268 = vpop.f32.mrb[0].mxu0
    %269 = vdwg.mxu0
    %v270 = vmax.f32 %v265, 0.0
    %v271 = vpack.c.bf16 %v270, %v270
    %v272 = vld [vmem:[%s9] sm:$0xf]
    %v273 = vld [vmem:[%s9 + $0x4] sm:$0xf]
    %v274 = vld [vmem:[%s9 + $0x8] sm:$0xf]
    %v275 = vld [vmem:[%s9 + $0xc] sm:$0xf]
    %v276 = vld [vmem:[%s10] sm:$0x1]
    %v278 = vlaneseq
    %v279 = vshrl.u32 %v278, 7
    %v280 = vsub.s32 0, %v279
    %v281 = vrot.slane %v276, %v280
    %v287 = vunpack.c.l.b16 %v272
    %v288 = vunpack.c.l.b16 %v273
    %v289 = vunpack.c.l.b16 %v274
    %v290 = vunpack.c.l.b16 %v275
    %v291 = vpack.c.b16 %v288, %v287
    %v292 = vpack.c.b16 %v290, %v289
    %v296 = vsel %vm141, %v271, 0
    %298 = vmatprep.subr.bf16.mxu0 0
    %299 = vmatpush1.bf16.msra.mxu0 %v291
    %300 = vmatprep.subr.bf16.mxu0 0
    %301 = vmatpush1.bf16.msra.mxu0 %v292
    %302 = vmatprep.subr.bf16.mxu0 0
    %303 = vmatpush1.bf16.msra.mxu0 0
    %304 = vmatprep.subr.bf16.mxu0 0
    %305 = vmatpush1.bf16.msra.mxu0 0
    %306 = vmatprep.subr.bf16.mxu0 0
    %307 = vmatpush1.bf16.msra.mxu0 0
    %308 = vmatprep.subr.bf16.mxu0 0
    %309 = vmatpush1.bf16.msra.mxu0 0
    %310 = vmatprep.subr.bf16.mxu0 0
    %311 = vmatpush1.bf16.msra.mxu0 0
    %312 = vmatprep.subr.bf16.mxu0 0
    %313 = vmatpush1.bf16.msra.mxu0 0
    %314 = vmatprep.subr.bf16.mxu0 0
    %315 = vmatpush1.bf16.msra.mxu0 0
    %316 = vmatprep.subr.bf16.mxu0 0
    %317 = vmatpush1.bf16.msra.mxu0 0
    %318 = vmatprep.subr.bf16.mxu0 0
    %319 = vmatpush1.bf16.msra.mxu0 0
    %320 = vmatprep.subr.bf16.mxu0 0
    %321 = vmatpush1.bf16.msra.mxu0 0
    %322 = vmatprep.subr.bf16.mxu0 0
    %323 = vmatpush1.bf16.msra.mxu0 0
    %324 = vmatprep.subr.bf16.mxu0 0
    %325 = vmatpush1.bf16.msra.mxu0 0
    %326 = vmatprep.subr.bf16.mxu0 0
    %327 = vmatpush1.bf16.msra.mxu0 0
    %328 = vmatprep.subr.bf16.mxu0 0
    %329 = vmatpush1.bf16.msra.mxu0 0
    %330 = vmatprep.mubr.bf16.mxu0 0
    %331 = vmatmul.mubr.bf16.gmra.mrb[0].mxu0 %v296
    %v332 = vpop.f32.mrb[0].mxu0
    %v333 = vadd.f32 %v281, %v332
    %v334 = vpop.f32.mrb[0].mxu0
    %v335 = vpop.f32.mrb[0].mxu0
    %v336 = vpop.f32.mrb[0].mxu0
    %337 = vdwg.mxu0
    %338 = vst [vmem:[#allocation2] sm:$0xff] %v333
    // Predicated region
    $region46: #{tpu_custom_call.1} parent=1 // pred_check
      _
    $region47: #{tpu_custom_call.1} parent=1 // pred_check_branch
      %340 = sbr.rel (0) target = $region49
    $region48: #{tpu_custom_call.1} parent=1 // pred_region
      %s342 = ssub.s32 128, 128
      %343 = vsyncadd [#allocation3], %s342
      %s345 = sshll.u32 [#allocation2], 4
      %s346 = int_to_ptr.vmem [resolvable:$true] %s345
      %348 = dma.vmem_to_hbm [thread:$0]  %s346, 128, %s11, [#allocation3]
    $region49: #{tpu_custom_call.1} parent=1 // pred_fallthru
      _
    // Predicated region
    $region50: #{tpu_custom_call.1} parent=1 // pred_check
      _
    $region51: #{tpu_custom_call.1} parent=1 // pred_check_branch
      %350 = sbr.rel (0) target = $region53
    $region52: #{tpu_custom_call.1} parent=1 // pred_region
      %351 = dma.done [#allocation3], 128
    $region53: #{tpu_custom_call.1} parent=1 // pred_fallthru
      _
    %352 = vsyncpa [#allocation3], 1

</llo_original>
